<compile_context>
chip_gen: v7x
topology: tpu7x:2x2x1
jax: 0.10.0
libtpu: 0.0.40
codegen_flags: <defaults>
</compile_context>

<pallas_src>
import functools

import jax
import jax.numpy as jnp
from jax.experimental import pallas as pl
from jax.experimental.pallas import tpu as pltpu

_LANE = 128       # feature dims are zero-padded to multiples of this
_MXU_TILE = 256   # node tile alignment (matches the 256-wide MXU on v6e/v7x)


def _round_up(x, m):
    return (x + m - 1) // m * m


def _vmem_budget_bytes():
    """~75% of the chip's physical VMEM (96 MiB on v5e/v6e, 48 MiB on v7x)."""
    try:
        cap = pltpu.get_tpu_info().vmem_capacity_bytes
    except Exception:                      # conservative fallback
        cap = 64 * 1024 * 1024
    return int(cap) * 3 // 4


def _compiler_params(dim_sem, vmem_budget):
    return pltpu.CompilerParams(
        dimension_semantics=dim_sem,
        vmem_limit_bytes=int(vmem_budget),
    )


# ----------------------------------------------------------------------------
# Pallas kernels
# ----------------------------------------------------------------------------
def _fused_kernel(a_ref, x0_ref, wt_ref, b_ref, o_ref, h_ref, *, num_layers):
    """One grid step == one GCN layer; A_hat and the activation stay in VMEM."""
    layer = pl.program_id(0)

    @pl.when(layer == 0)
    def _():
        h_ref[...] = x0_ref[...]

    # aggregate: (N, N) @ (N, F), f32 accumulation on the MXU
    ax = jnp.dot(a_ref[...], h_ref[...], preferred_element_type=jnp.float32)
    # transform: (N, F) @ (F, F); weights already stored as W^T -> no transpose
    h = jnp.dot(ax.astype(wt_ref.dtype), wt_ref[...],
                preferred_element_type=jnp.float32) + b_ref[...]

    # Hidden layers get ReLU.  Writing the ReLU'd value on the last layer is
    # harmless because h_ref is never read again after the final grid step.
    h_ref[...] = jnp.maximum(h, 0.0).astype(h_ref.dtype)

    @pl.when(layer == num_layers - 1)
    def _():
        o_ref[...] = h.astype(o_ref.dtype)     # final layer: no ReLU


def _transform_kernel(x_ref, wt_ref, o_ref):
    # (tm, fin) @ (fin, fout) -> (tm, fout)
    o_ref[...] = jnp.dot(
        x_ref[...], wt_ref[...], preferred_element_type=jnp.float32
    ).astype(o_ref.dtype)


def _agg_kernel(a_ref, xw_ref, b_ref, o_ref, acc_ref, *, apply_relu):
    # K-tiled:  acc += A_hat[i, k] @ (xW)[k]  ; finalize on last k.
    k = pl.program_id(1)

    @pl.when(k == 0)
    def _():
        acc_ref[...] = jnp.zeros_like(acc_ref)

    acc_ref[...] += jnp.dot(a_ref[...], xw_ref[...],
                            preferred_element_type=jnp.float32)

    @pl.when(k == pl.num_programs(1) - 1)
    def _():
        h = acc_ref[...] + b_ref[...]
        if apply_relu:
            h = jnp.maximum(h, 0.0)
        o_ref[...] = h.astype(o_ref.dtype)


def _agg_transform_kernel(a_ref, x_ref, wt_ref, b_ref, o_ref, acc_ref, *,
                          apply_relu):
    # K-tiled:  acc += A_hat[i, k] @ x[k] ; transform + bias on last k.
    k = pl.program_id(1)

    @pl.when(k == 0)
    def _():
        acc_ref[...] = jnp.zeros_like(acc_ref)

    acc_ref[...] += jnp.dot(a_ref[...], x_ref[...],
                            preferred_element_type=jnp.float32)

    @pl.when(k == pl.num_programs(1) - 1)
    def _():
        h = jnp.dot(acc_ref[...].astype(wt_ref.dtype), wt_ref[...],
                    preferred_element_type=jnp.float32) + b_ref[...]
        if apply_relu:
            h = jnp.maximum(h, 0.0)
        o_ref[...] = h.astype(o_ref.dtype)


# ----------------------------------------------------------------------------
# pallas_call wrappers (tiled / large-graph path)
# ----------------------------------------------------------------------------
def _transform(x, wt, t, vmem_budget):
    n_pad, fin = x.shape
    fout = wt.shape[1]
    return pl.pallas_call(
        _transform_kernel,
        out_shape=jax.ShapeDtypeStruct((n_pad, fout), jnp.bfloat16),
        grid=(n_pad // t,),
        in_specs=[
            pl.BlockSpec((t, fin), lambda i: (i, 0)),
            pl.BlockSpec((fin, fout), lambda i: (0, 0)),
        ],
        out_specs=pl.BlockSpec((t, fout), lambda i: (i, 0)),
        compiler_params=_compiler_params(("parallel",), vmem_budget),
        cost_estimate=pl.CostEstimate(
            flops=2 * n_pad * fin * fout, transcendentals=0,
            bytes_accessed=2 * n_pad * (fin + fout) + 2 * fin * fout),
    )(x, wt)


def _aggregate(a_hat, xw, b, t, *, apply_relu, out_dtype, vmem_budget):
    n_pad = a_hat.shape[0]
    fout = xw.shape[1]
    kernel = functools.partial(_agg_kernel, apply_relu=apply_relu)
    return pl.pallas_call(
        kernel,
        out_shape=jax.ShapeDtypeStruct((n_pad, fout), out_dtype),
        grid=(n_pad // t, n_pad // t),             # reduction axis (K) is last
        in_specs=[
            pl.BlockSpec((t, t), lambda i, k: (i, k)),       # A_hat panel
            pl.BlockSpec((t, fout), lambda i, k: (k, 0)),    # x @ W^T panel
            pl.BlockSpec((1, fout), lambda i, k: (0, 0)),    # bias
        ],
        out_specs=pl.BlockSpec((t, fout), lambda i, k: (i, 0)),
        scratch_shapes=[pltpu.VMEM((t, fout), jnp.float32)],
        compiler_params=_compiler_params(("parallel", "arbitrary"), vmem_budget),
        cost_estimate=pl.CostEstimate(
            flops=2 * n_pad * n_pad * fout, transcendentals=0,
            bytes_accessed=2 * n_pad * n_pad + 4 * n_pad * fout),
    )(a_hat, xw, b)


def _aggregate_transform(a_hat, x, wt, b, t, *, apply_relu, out_dtype,
                         vmem_budget):
    n_pad = a_hat.shape[0]
    fin, fout = wt.shape
    kernel = functools.partial(_agg_transform_kernel, apply_relu=apply_relu)
    return pl.pallas_call(
        kernel,
        out_shape=jax.ShapeDtypeStruct((n_pad, fout), out_dtype),
        grid=(n_pad // t, n_pad // t),             # reduction axis (K) is last
        in_specs=[
            pl.BlockSpec((t, t), lambda i, k: (i, k)),       # A_hat panel
            pl.BlockSpec((t, fin), lambda i, k: (k, 0)),     # x panel
            pl.BlockSpec((fin, fout), lambda i, k: (0, 0)),  # W^T (resident)
            pl.BlockSpec((1, fout), lambda i, k: (0, 0)),    # bias
        ],
        out_specs=pl.BlockSpec((t, fout), lambda i, k: (i, 0)),
        scratch_shapes=[pltpu.VMEM((t, fin), jnp.float32)],
        compiler_params=_compiler_params(("parallel", "arbitrary"), vmem_budget),
        cost_estimate=pl.CostEstimate(
            flops=2 * n_pad * n_pad * fin + 2 * n_pad * fin * fout,
            transcendentals=0,
            bytes_accessed=2 * n_pad * n_pad + 2 * n_pad * (fin + 2 * fout)),
    )(a_hat, x, wt, b)


# ----------------------------------------------------------------------------
# Tile / VMEM sizing
# ----------------------------------------------------------------------------
def _pick_tile(num_nodes, f_pad, out_bytes, vmem_budget):
    """Largest MXU-aligned node tile whose full working set fits the budget."""
    cap = max(_round_up(num_nodes, _MXU_TILE), _MXU_TILE)
    t = _round_up(min(1024, cap), _MXU_TILE)
    while t > _MXU_TILE:
        need = (2 * t * t * 2                 # A_hat (tm, tk) bf16, 2x buffered
                + 2 * t * f_pad * 2           # activation panel bf16, 2x buffered
                + 2 * f_pad * f_pad * 2       # resident W^T bf16, 2x buffered
                + 2 * t * f_pad * out_bytes   # output tile, 2x buffered
                + t * f_pad * 4               # f32 accumulator scratch
                + 2 * t * f_pad * 4)          # f32 matmul temporaries / headroom
        if need <= vmem_budget:
            break
        t -= _MXU_TILE
    return max(t, _MXU_TILE)


def _fused_vmem_bytes(n_pad, f_max):
    return (2 * n_pad * n_pad * 2        # A_hat bf16 (double-buffered)
            + 2 * n_pad * f_max * 2      # x0 bf16
            + 2 * f_max * f_max * 2      # per-layer W^T block, double-buffered
            + n_pad * f_max * 2          # bf16 activation scratch
            + 2 * n_pad * f_max * 4      # f32 matmul temporaries
            + 2 * n_pad * f_max * 4)     # f32 output block


# ----------------------------------------------------------------------------
# Forward passes
# ----------------------------------------------------------------------------
def _forward_fused(x, a_hat, params, f_max, vmem_budget):
    num_nodes, num_feat = x.shape
    n_pad = _round_up(num_nodes, _LANE)
    num_layers = len(params)

    a = jnp.pad(a_hat, ((0, n_pad - num_nodes),) * 2).astype(jnp.bfloat16)
    x0 = jnp.pad(x, ((0, n_pad - num_nodes),
                     (0, f_max - num_feat))).astype(jnp.bfloat16)
    wt_stack = jnp.stack([
        jnp.pad(wt, ((0, f_max - wt.shape[0]), (0, f_max - wt.shape[1])))
        for wt, _ in params
    ]).astype(jnp.bfloat16)                                   # (L, F, F)
    b_stack = jnp.stack([
        jnp.pad(b, (0, f_max - b.shape[0])) for _, b in params
    ]).astype(jnp.float32).reshape(num_layers, 1, f_max)      # (L, 1, F)

    kernel = functools.partial(_fused_kernel, num_layers=num_layers)
    out = pl.pallas_call(
        kernel,
        out_shape=jax.ShapeDtypeStruct((n_pad, f_max), jnp.float32),
        grid=(num_layers,),
        in_specs=[
            pl.BlockSpec((n_pad, n_pad), lambda l: (0, 0)),        # A_hat
            pl.BlockSpec((n_pad, f_max), lambda l: (0, 0)),        # x0
            pl.BlockSpec((None, f_max, f_max), lambda l: (l, 0, 0)),  # W^T[l]
            pl.BlockSpec((None, 1, f_max), lambda l: (l, 0, 0)),      # b[l]
        ],
        out_specs=pl.BlockSpec((n_pad, f_max), lambda l: (0, 0)),
        scratch_shapes=[pltpu.VMEM((n_pad, f_max), jnp.bfloat16)],
        compiler_params=_compiler_params(("arbitrary",), vmem_budget),
        cost_estimate=pl.CostEstimate(
            flops=2 * num_layers * (n_pad * n_pad * f_max + n_pad * f_max * f_max),
            transcendentals=0,
            bytes_accessed=(2 * n_pad * n_pad + 2 * n_pad * f_max
                            + 2 * num_layers * f_max * f_max
                            + 4 * n_pad * f_max)),
    )(a, x0, wt_stack, b_stack)
    return out


def _forward_tiled(x, a_hat, params, f_pads, vmem_budget, tile_override):
    num_nodes = x.shape[0]
    fin0_pad = f_pads[0][0]
    f_max = max(max(p) for p in f_pads)
    if tile_override is not None:
        t = tile_override
    else:
        t = _pick_tile(num_nodes, f_max, 4, vmem_budget)
    n_pad = _round_up(num_nodes, t)

    a = jnp.pad(a_hat, ((0, n_pad - num_nodes),) * 2).astype(jnp.bfloat16)
    h = jnp.pad(x, ((0, n_pad - num_nodes),
                    (0, fin0_pad - x.shape[1]))).astype(jnp.bfloat16)

    for i, ((wt, b), (fin_pad, fout_pad)) in enumerate(zip(params, f_pads)):
        last = i == len(params) - 1
        wt_p = jnp.pad(wt, ((0, fin_pad - wt.shape[0]),
                            (0, fout_pad - wt.shape[1]))).astype(jnp.bfloat16)
        b_p = jnp.pad(b, (0, fout_pad - b.shape[0])
                      ).astype(jnp.float32).reshape(1, fout_pad)
        out_dtype = jnp.float32 if last else jnp.bfloat16
        if fout_pad < fin_pad:
            # transform first: the O(N^2) aggregation runs at the narrow width
            xw = _transform(h, wt_p, t, vmem_budget)
            h = _aggregate(a, xw, b_p, t, apply_relu=not last,
                           out_dtype=out_dtype, vmem_budget=vmem_budget)
        else:
            h = _aggregate_transform(a, h, wt_p, b_p, t, apply_relu=not last,
                                     out_dtype=out_dtype,
                                     vmem_budget=vmem_budget)
    return h


def balanced_gcn_forward_from_adj(x, a_hat, params, *, use_fused=None,
                                  tile_override=None):
    """Forward pass with a precomputed (hoisted/cached) normalized adjacency."""
    num_nodes = x.shape[0]
    num_classes = params[-1][0].shape[1]
    budget = _vmem_budget_bytes()

    dims = [(wt.shape[0], wt.shape[1]) for wt, _ in params]
    f_pads = [(_round_up(fi, _LANE), _round_up(fo, _LANE)) for fi, fo in dims]
    f_max = max(max(p) for p in f_pads)

    if use_fused is None:
        use_fused = _fused_vmem_bytes(_round_up(num_nodes, _LANE), f_max) <= budget

    if use_fused:
        out = _forward_fused(x, a_hat, params, f_max, budget)
    else:
        out = _forward_tiled(x, a_hat, params, f_pads, budget, tile_override)
    return out[:num_nodes, :num_classes]


def balanced_gcn_forward(x, edge_index, params, **kwargs):
    """Matches BalancedGCN.forward(x, edge_index).  For repeated calls on the
    same graph, build A_hat once and use balanced_gcn_forward_from_adj."""
    a_hat = build_normalized_adjacency(edge_index, x.shape[0])
    return balanced_gcn_forward_from_adj(x, a_hat, params, **kwargs)


# ----------------------------------------------------------------------------
# Glue: GCN normalization (dense), parameter init, pure-JAX reference
# ----------------------------------------------------------------------------
def build_normalized_adjacency(edge_index, num_nodes):
    """A_hat = D^-1/2 (A + I) D^-1/2 matching PyG gcn_norm defaults.
    Duplicate edges sum; self-loops follow add_remaining_self_loops semantics
    (every node ends up with exactly one unit self-loop, no double counting)."""
    src, dst = edge_index[0], edge_index[1]
    adj = jnp.zeros((num_nodes, num_nodes), jnp.float32)
    adj = adj.at[dst, src].add(1.0)                       # message src -> dst
    eye = jnp.eye(num_nodes, dtype=jnp.float32)
    adj = adj * (1.0 - eye) + eye                         # diagonal := 1
    deg = jnp.sum(adj, axis=1)
    dinv = jnp.where(deg > 0, jax.lax.rsqrt(deg), 0.0)
    return dinv[:, None] * adj * dinv[None, :]


def glorot_uniform_t(key, fan_in, fan_out):
    """Glorot-uniform weight stored pre-transposed as (fin, fout) = W^T."""
    limit = jnp.sqrt(6.0 / (fan_in + fan_out))
    return jax.random.uniform(key, (fan_in, fan_out), jnp.float32,
                              minval=-limit, maxval=limit)


def init_balanced_gcn_params(key, num_features, num_classes,
                             hidden_channels, num_layers):
    dims = []
    if num_layers == 1:
        dims.append((num_features, num_classes))
    else:
        dims.append((num_features, hidden_channels))
        for _ in range(num_layers - 2):
            dims.append((hidden_channels, hidden_channels))
        dims.append((hidden_channels, num_classes))

    params = []
    for fin, fout in dims:
        key, sub = jax.random.split(key)
        wt = glorot_uniform_t(sub, fin, fout)      # stored as W^T: (fin, fout)
        b = jnp.zeros((fout,), jnp.float32)        # GCNConv bias init = zeros
        params.append((wt, b))
    return params


def reference_forward(x, a_hat, params):
    """Pure-JAX f32 reference for tolerance checking."""
    h = x
    for i, (wt, b) in enumerate(params):
        h = a_hat @ (h @ wt) + b
        if i < len(params) - 1:
            h = jax.nn.relu(h)
    return h


# ----------------------------------------------------------------------------
# Demo
# ----------------------------------------------------------------------------
if __name__ == "__main__":
    key = jax.random.PRNGKey(0)

    num_nodes = 200
    num_features = 12
    hidden_channels = 32
    num_classes = 5
    num_layers = 3

    k_x, k_e, k_p = jax.random.split(key, 3)

    # deterministic node features
    x = jax.random.normal(k_x, (num_nodes, num_features), jnp.float32)

    # deterministic edge_index (2, E): a ring plus random chords (both dirs)
    ring_src = jnp.arange(num_nodes, dtype=jnp.int32)
    ring_dst = (ring_src + 1) % num_nodes
    extra_src = jax.random.randint(k_e, (64,), 0, num_nodes, jnp.int32)
    extra_dst = jax.random.randint(
        jax.random.fold_in(k_e, 1), (64,), 0, num_nodes, jnp.int32)
    src = jnp.concatenate([ring_src, ring_dst, extra_src, extra_dst])
    dst = jnp.concatenate([ring_dst, ring_src, extra_dst, extra_src])
    edge_index = jnp.stack([src, dst], axis=0)

    params = init_balanced_gcn_params(
        k_p, num_features, num_classes, hidden_channels, num_layers)

    # adjacency built once per graph (hoisted out of the forward)
    a_hat = build_normalized_adjacency(edge_index, num_nodes)
    ref = reference_forward(x, a_hat, params)

    # fused (small-graph) path via the module-parity entry point
    out_fused = balanced_gcn_forward(x, edge_index, params)
    out_fused = jax.block_until_ready(out_fused)

    # K-tiled (large-graph) path, forced with a small tile to exercise the
    # multi-step row/K grid and the f32 accumulator on this small demo graph
    out_tiled = balanced_gcn_forward_from_adj(
        x, a_hat, params, use_fused=False, tile_override=128)
    out_tiled = jax.block_until_ready(out_tiled)

    assert out_fused.shape == (num_nodes, num_classes)
    assert out_tiled.shape == (num_nodes, num_classes)
    assert jnp.all(jnp.isfinite(out_fused))
    assert jnp.all(jnp.isfinite(out_tiled))
    assert jnp.allclose(out_fused, ref, rtol=1e-1, atol=1e-1)
    assert jnp.allclose(out_tiled, ref, rtol=1e-1, atol=1e-1)
    print("KERNEL_OK")
</pallas_src>

<mosaic_0001>
module attributes {stable_mosaic.version = 11 : i64} {
  func.func @_fused_kernel(%arg0: i32, %arg1: memref<256x256xbf16, #tpu.memory_space<vmem>>, %arg2: memref<256x128xbf16, #tpu.memory_space<vmem>>, %arg3: memref<1x128x128xbf16, #tpu.memory_space<vmem>>, %arg4: memref<1x1x128xf32, #tpu.memory_space<vmem>>, %arg5: memref<256x128xf32, #tpu.memory_space<vmem>>, %arg6: memref<256x128xbf16, #tpu.memory_space<vmem>>) attributes {dimension_semantics = [#tpu.dimension_semantics<arbitrary>], iteration_bounds = array<i64: 3>, scalar_prefetch = 0 : i64, scratch_operands = 1 : i64, tpu.core_type = #tpu.core_type<tc>, window_params = [{pipeline_mode = #tpu.pipeline_mode<synchronous>, transform_indices = @transform_0, window_bounds = array<i64: 256, 256>}, {pipeline_mode = #tpu.pipeline_mode<synchronous>, transform_indices = @transform_1, window_bounds = array<i64: 256, 128>}, {transform_indices = @transform_2, window_bounds = array<i64: 1, 128, 128>}, {transform_indices = @transform_3, window_bounds = array<i64: 1, 1, 128>}, {pipeline_mode = #tpu.pipeline_mode<synchronous>, transform_indices = @transform_4, window_bounds = array<i64: 256, 128>}]} {
    %c0_i32 = arith.constant 0 : i32
    %0 = arith.cmpi eq, %arg0, %c0_i32 : i32
    %1 = arith.extui %0 : i1 to i32
    %c0_i32_0 = arith.constant 0 : i32
    %2 = arith.cmpi ne, %1, %c0_i32_0 : i32
    scf.if %2 {
      %c0_15 = arith.constant 0 : index
      %c0_16 = arith.constant 0 : index
      %21 = vector.load %arg2[%c0_15, %c0_16] : memref<256x128xbf16, #tpu.memory_space<vmem>>, vector<256x128xbf16>
      %c0_17 = arith.constant 0 : index
      %c0_18 = arith.constant 0 : index
      %22 = vector.load %arg6[%c0_17, %c0_18] : memref<256x128xbf16, #tpu.memory_space<vmem>>, vector<256x128xbf16>
      tpu.vector_store %arg6[%c0_17, %c0_18], %21 {strides = array<i32>} : memref<256x128xbf16, #tpu.memory_space<vmem>>, vector<256x128xbf16>,
    } else {
    }
    %c0 = arith.constant 0 : index
    %c0_1 = arith.constant 0 : index
    %3 = vector.load %arg1[%c0, %c0_1] : memref<256x256xbf16, #tpu.memory_space<vmem>>, vector<256x256xbf16>
    %c0_2 = arith.constant 0 : index
    %c0_3 = arith.constant 0 : index
    %4 = vector.load %arg6[%c0_2, %c0_3] : memref<256x128xbf16, #tpu.memory_space<vmem>>, vector<256x128xbf16>
    %cst = arith.constant dense<0.000000e+00> : vector<256x128xf32>
    %5 = tpu.matmul %3, %4, %cst {dimension_numbers = #tpu.dot_dimension_numbers<[1], [0], [0], [1], [0, 0, 1, 1], [], []>} : vector<256x256xbf16>, vector<256x128xbf16>, vector<256x128xf32> -> vector<256x128xf32>
    %6 = arith.truncf %5 : vector<256x128xf32> to vector<256x128xbf16>
    %c0_4 = arith.constant 0 : index
    %c0_5 = arith.constant 0 : index
    %c0_6 = arith.constant 0 : index
    %7 = vector.load %arg3[%c0_4, %c0_5, %c0_6] : memref<1x128x128xbf16, #tpu.memory_space<vmem>>, vector<1x128x128xbf16>
    %8 = vector.shape_cast %7 : vector<1x128x128xbf16> to vector<128x128xbf16>
    %cst_7 = arith.constant dense<0.000000e+00> : vector<256x128xf32>
    %9 = tpu.matmul %6, %8, %cst_7 {dimension_numbers = #tpu.dot_dimension_numbers<[1], [0], [0], [1], [0, 0, 1, 1], [], []>} : vector<256x128xbf16>, vector<128x128xbf16>, vector<256x128xf32> -> vector<256x128xf32>
    %c0_8 = arith.constant 0 : index
    %c0_9 = arith.constant 0 : index
    %c0_10 = arith.constant 0 : index
    %10 = vector.load %arg4[%c0_8, %c0_9, %c0_10] : memref<1x1x128xf32, #tpu.memory_space<vmem>>, vector<1x1x128xf32>
    %11 = vector.shape_cast %10 : vector<1x1x128xf32> to vector<1x128xf32>
    %12 = vector.broadcast %11 : vector<1x128xf32> to vector<256x128xf32>
    %13 = arith.addf %9, %12 : vector<256x128xf32>
    %cst_11 = arith.constant 0.000000e+00 : f32
    %14 = vector.broadcast %cst_11 : f32 to vector<256x128xf32>
    %15 = arith.maximumf %13, %14 : vector<256x128xf32>
    %16 = arith.truncf %15 : vector<256x128xf32> to vector<256x128xbf16>
    %c0_12 = arith.constant 0 : index
    %c0_13 = arith.constant 0 : index
    %17 = vector.load %arg6[%c0_12, %c0_13] : memref<256x128xbf16, #tpu.memory_space<vmem>>, vector<256x128xbf16>
    tpu.vector_store %arg6[%c0_12, %c0_13], %16 {strides = array<i32>} : memref<256x128xbf16, #tpu.memory_space<vmem>>, vector<256x128xbf16>,
    %c2_i32 = arith.constant 2 : i32
    %18 = arith.cmpi eq, %arg0, %c2_i32 : i32
    %19 = arith.extui %18 : i1 to i32
    %c0_i32_14 = arith.constant 0 : i32
    %20 = arith.cmpi ne, %19, %c0_i32_14 : i32
    scf.if %20 {
      %c0_15 = arith.constant 0 : index
      %c0_16 = arith.constant 0 : index
      %21 = vector.load %arg5[%c0_15, %c0_16] : memref<256x128xf32, #tpu.memory_space<vmem>>, vector<256x128xf32>
      tpu.vector_store %arg5[%c0_15, %c0_16], %13 {strides = array<i32>} : memref<256x128xf32, #tpu.memory_space<vmem>>, vector<256x128xf32>,
    } else {
    }
    return
  }
  func.func @transform_0(%arg0: i32) -> (i32, i32) {
    %c0_i32 = arith.constant 0 : i32
    %c0_i32_0 = arith.constant 0 : i32
    %c0_i32_1 = arith.constant 0 : i32
    return %c0_i32, %c0_i32_0 : i32, i32
  }
  func.func @transform_1(%arg0: i32) -> (i32, i32) {
    %c0_i32 = arith.constant 0 : i32
    %c0_i32_0 = arith.constant 0 : i32
    %c0_i32_1 = arith.constant 0 : i32
    return %c0_i32, %c0_i32_0 : i32, i32
  }
  func.func @transform_2(%arg0: i32) -> (i32, i32, i32) {
    %c0_i32 = arith.constant 0 : i32
    %c0_i32_0 = arith.constant 0 : i32
    %c0_i32_1 = arith.constant 0 : i32
    return %arg0, %c0_i32, %c0_i32_0 : i32, i32, i32
  }
  func.func @transform_3(%arg0: i32) -> (i32, i32, i32) {
    %c0_i32 = arith.constant 0 : i32
    %c0_i32_0 = arith.constant 0 : i32
    %c0_i32_1 = arith.constant 0 : i32
    return %arg0, %c0_i32, %c0_i32_0 : i32, i32, i32
  }
  func.func @transform_4(%arg0: i32) -> (i32, i32) {
    %c0_i32 = arith.constant 0 : i32
    %c0_i32_0 = arith.constant 0 : i32
    %c0_i32_1 = arith.constant 0 : i32
    return %c0_i32, %c0_i32_0 : i32, i32
  }
}

</mosaic_0001>

<llo_original>
// kernel: tpu_custom_call.1
$region0: #{tpu_custom_call.1}
  #allocation0 [shape = 'u32[]', space=smem, size = 0x4, offset = 0x4, fixed_abs, tag = 'smem constant byte address 0x4 - core index']
  #allocation1 [shape = 'u32[144,128]{1,0:T(1,128)}', space=vmem, size = 0x12000, scoped, tag = 'internal scratch']
  #allocation2 [shape = 'bf16[256,128]{1,0:T(16,128)(2,1)}', space=vmem, size = 0x10000, scoped, tag = 'scratch operand']
  %s0 = inlined_call_operand.hbm [shape: bf16[256,256], index: 0, kind: input, shape index: {}]
  %s1 = inlined_call_operand.hbm [shape: bf16[256,128], index: 1, kind: input, shape index: {}]
  %s2 = inlined_call_operand.hbm [shape: bf16[3,128,128], index: 2, kind: input, shape index: {}]
  %s3 = inlined_call_operand.vmem [shape: f32[3,1,128], index: 3, kind: input, shape index: {}]
  %s4 = inlined_call_operand.hbm [shape: f32[256,128], index: 4, kind: output, shape index: {}]
  %s5 = sld [smem:[#allocation0]]
  $region69: #{tpu_custom_call.1} parent=0
    _
  %s7 = ssub.s32 1, %s5
  %s8 = scalar_select 0, %s7, %s5
  $region1: #{tpu_custom_call.1} parent=0
    #allocation3 [shape = 'u8[131072]{0}', space=vmem, size = 0x20000, scoped, tag = 'input window, operand 0, single buffered']
    #allocation4 [shape = 's32[2]{0}', space=sflag, size = 0x8, scoped, tag = 'scoped memory for tpu_custom_call.1']
    #allocation5 [shape = 's32[2]{0}', space=sflag, size = 0x8, scoped, tag = 'scoped memory for tpu_custom_call.1']
    #allocation6 [shape = 'u8[65536]{0}', space=vmem, size = 0x10000, scoped, tag = 'input window, operand 1, single buffered']
    #allocation7 [shape = 's32[1]{0}', space=sflag, size = 0x4, scoped, tag = 'scoped memory for tpu_custom_call.1']
    #allocation8 [shape = 'u8[65536]{0}', space=vmem, size = 0x10000, scoped, tag = 'input window, operand 2']
    #allocation9 [shape = 'u8[131072]{0}', space=vmem, size = 0x20000, scoped, tag = 'output window, operand 0, single buffered']
    %9 = vsyncpa [#allocation4], 0
    %10 = vsyncpa [#allocation7], 0
    %11 = vsyncpa [#allocation5], 0
    loop: start=0, step=1, limit=5
    $region2: #{tpu_custom_call.1} parent=1 // loop_pre_header
      _
    $region3: #{tpu_custom_call.1} parent=1 // loop_header
      %s13 = sphi 0, %s17
      %p14 = scmp.ge.s32.totalorder %s13, 5
      %s21 = sphi 0, %s21
      %s23 = sphi 0, %s21
      %s24 = sphi 0, %s23
      %s38 = sphi 0, %s24
      %s42 = sphi 0, %s42
      %s44 = sphi 0, %s42
      %s45 = sphi 0, %s44
      %s59 = sphi 0, %s45
      %s65 = sphi 0, %s67
      %s68 = sphi 0, %s65
      %s69 = sphi 0, %s68
      %s85 = sphi 0, %s69
      %s91 = sphi 0, %s93
      %s94 = sphi 0, %s91
      %s95 = sphi 0, %s94
      %s111 = sphi 0, %s95
      %s115 = sphi 0, %s115
      %s117 = sphi 0, %s115
      %s118 = sphi 0, %s117
      %s132 = sphi 0, %s118
    $region4: #{tpu_custom_call.1} parent=1 // loop_header_branch
      %16 = sbr.rel (%p14) target = $region8
    $region5: #{tpu_custom_call.1} parent=1 // loop_body
      %s18 = ssub.s32 %s13, 1
      %s19 = ssub.s32 %s13, 2
      %s20 = sadd.s32 %s13, 1
      %s22 = sadd.s32 %s21, 1
      %p25 = scmp.eq.s32.totalorder %s13, 2
      %p26 = scmp.ne.s32.totalorder %s21, %s23
      %p27 = scmp.eq.s32.totalorder %s13, 0
      %p28 = por %p26, %p27
      %p29 = scmp.ne.s32.totalorder %s21, %s23
      %p30 = scmp.eq.s32.totalorder %s18, 2
      %p31 = por %p29, %p30
      %p32 = scmp.ne.s32.totalorder %s23, %s24
      %p33 = scmp.eq.s32.totalorder %s18, 0
      %p34 = por %p32, %p33
      %p35 = scmp.ne.s32.totalorder %s23, %s24
      %p36 = scmp.eq.s32.totalorder %s19, 2
      %p37 = por %p35, %p36
      %p39 = scmp.ne.s32.totalorder %s24, %s38
      %p40 = scmp.eq.s32.totalorder %s19, 0
      %p41 = por %p39, %p40
      %s43 = sadd.s32 %s42, 1
      %p46 = scmp.eq.s32.totalorder %s13, 2
      %p47 = scmp.ne.s32.totalorder %s42, %s44
      %p48 = scmp.eq.s32.totalorder %s13, 0
      %p49 = por %p47, %p48
      %p50 = scmp.ne.s32.totalorder %s42, %s44
      %p51 = scmp.eq.s32.totalorder %s18, 2
      %p52 = por %p50, %p51
      %p53 = scmp.ne.s32.totalorder %s44, %s45
      %p54 = scmp.eq.s32.totalorder %s18, 0
      %p55 = por %p53, %p54
      %p56 = scmp.ne.s32.totalorder %s44, %s45
      %p57 = scmp.eq.s32.totalorder %s19, 2
      %p58 = por %p56, %p57
      %p60 = scmp.ne.s32.totalorder %s45, %s59
      %p61 = scmp.eq.s32.totalorder %s19, 0
      %p62 = por %p60, %p61
      %s63 = ssub.s32 %s13, %s20
      %p64 = scmp.eq.s32.totalorder %s63, 0
      %s66 = sadd.s32 %s65, 1
      %s67 = scalar_select %p64, %s65, %s66
      %p70 = pneg %p64
      %p71 = scmp.eq.s32.totalorder %s13, 2
      %p72 = por %p70, %p71
      %p73 = scmp.ne.s32.totalorder %s65, %s68
      %p74 = scmp.eq.s32.totalorder %s13, 0
      %p75 = por %p73, %p74
      %p76 = scmp.ne.s32.totalorder %s65, %s68
      %p77 = scmp.eq.s32.totalorder %s18, 2
      %p78 = por %p76, %p77
      %p79 = scmp.ne.s32.totalorder %s68, %s69
      %p80 = scmp.eq.s32.totalorder %s18, 0
      %p81 = por %p79, %p80
      %p82 = scmp.ne.s32.totalorder %s68, %s69
      %p83 = scmp.eq.s32.totalorder %s19, 2
      %p84 = por %p82, %p83
      %p86 = scmp.ne.s32.totalorder %s69, %s85
      %p87 = scmp.eq.s32.totalorder %s19, 0
      %p88 = por %p86, %p87
      %s89 = ssub.s32 %s13, %s20
      %p90 = scmp.eq.s32.totalorder %s89, 0
      %s92 = sadd.s32 %s91, 1
      %s93 = scalar_select %p90, %s91, %s92
      %p96 = pneg %p90
      %p97 = scmp.eq.s32.totalorder %s13, 2
      %p98 = por %p96, %p97
      %p99 = scmp.ne.s32.totalorder %s91, %s94
      %p100 = scmp.eq.s32.totalorder %s13, 0
      %p101 = por %p99, %p100
      %p102 = scmp.ne.s32.totalorder %s91, %s94
      %p103 = scmp.eq.s32.totalorder %s18, 2
      %p104 = por %p102, %p103
      %p105 = scmp.ne.s32.totalorder %s94, %s95
      %p106 = scmp.eq.s32.totalorder %s18, 0
      %p107 = por %p105, %p106
      %p108 = scmp.ne.s32.totalorder %s94, %s95
      %p109 = scmp.eq.s32.totalorder %s19, 2
      %p110 = por %p108, %p109
      %p112 = scmp.ne.s32.totalorder %s95, %s111
      %p113 = scmp.eq.s32.totalorder %s19, 0
      %p114 = por %p112, %p113
      %s116 = sadd.s32 %s115, 1
      %p119 = scmp.eq.s32.totalorder %s13, 2
      %p120 = scmp.ne.s32.totalorder %s115, %s117
      %p121 = scmp.eq.s32.totalorder %s13, 0
      %p122 = por %p120, %p121
      %p123 = scmp.ne.s32.totalorder %s115, %s117
      %p124 = scmp.eq.s32.totalorder %s18, 2
      %p125 = por %p123, %p124
      %p126 = scmp.ne.s32.totalorder %s117, %s118
      %p127 = scmp.eq.s32.totalorder %s18, 0
      %p128 = por %p126, %p127
      %p129 = scmp.ne.s32.totalorder %s117, %s118
      %p130 = scmp.eq.s32.totalorder %s19, 2
      %p131 = por %p129, %p130
      %p133 = scmp.ne.s32.totalorder %s118, %s132
      %p134 = scmp.eq.s32.totalorder %s19, 0
      %p135 = por %p133, %p134
      %p136 = scmp.le.s32.totalorder 1, %s13
      %p137 = scmp.lt.s32.totalorder %s13, 4
      %p138 = pnand %p136, %p137
      %p139 = pneg %p138
      // Predicated region
      $region9: #{tpu_custom_call.1} parent=5 // pred_check
        _
      $region10: #{tpu_custom_call.1} parent=5 // pred_check_branch
        %141 = sbr.rel (%p138) target = $region12
      $region11: #{tpu_custom_call.1} parent=5 // pred_region
        %s142 = ssub.s32 %s13, 1
        // Predicated region
        $region13: #{tpu_custom_call.1} parent=11 // pred_check
          %p143 = pneg %p34
        $region14: #{tpu_custom_call.1} parent=11 // pred_check_branch
          %145 = sbr.rel (%p143) target = $region16
        $region15: #{tpu_custom_call.1} parent=11 // pred_region
          %s147 = ssub.s32 4096, 4096
          %148 = vsyncadd [#allocation4], %s147
          %s149 = sshll.u32 [#allocation3], 4
          %s150 = int_to_ptr.vmem [resolvable:$true] %s149
          %155 = dma.hbm_to_vmem [thread:$0]  %s0, 4096, %s150, [#allocation4], 128, 128, 8
        $region16: #{tpu_custom_call.1} parent=11 // pred_fallthru
          _
        // Predicated region
        $region17: #{tpu_custom_call.1} parent=11 // pred_check
          %p156 = pneg %p55
        $region18: #{tpu_custom_call.1} parent=11 // pred_check_branch
          %158 = sbr.rel (%p156) target = $region20
        $region19: #{tpu_custom_call.1} parent=11 // pred_region
          %s160 = ssub.s32 2048, 2048
          %161 = vsyncadd [#allocation7], %s160
          %s162 = sshll.u32 [#allocation6], 4
          %s163 = int_to_ptr.vmem [resolvable:$true] %s162
          %168 = dma.hbm_to_vmem [thread:$0]  %s1, 2048, %s163, [#allocation7], 64, 64, 4
        $region20: #{tpu_custom_call.1} parent=11 // pred_fallthru
          _
      $region12: #{tpu_custom_call.1} parent=5 // pred_fallthru
        _
      %p169 = scmp.lt.s32.totalorder %s13, 3
      // Predicated region
      $region21: #{tpu_custom_call.1} parent=5 // pred_check
        %p170 = pneg %p169
      $region22: #{tpu_custom_call.1} parent=5 // pred_check_branch
        %172 = sbr.rel (%p170) target = $region24
      $region23: #{tpu_custom_call.1} parent=5 // pred_region
        // Predicated region
        $region25: #{tpu_custom_call.1} parent=23 // pred_check
          %p173 = pneg %p75
        $region26: #{tpu_custom_call.1} parent=23 // pred_check_branch
          %175 = sbr.rel (%p173) target = $region28
        $region27: #{tpu_custom_call.1} parent=23 // pred_region
          %s176 = sand.u32 %s13, 1
          %s177 = scalar_lea.sflag [#allocation4], %s176
          %s178 = sand.u32 %s65, 1
          %s179 = smul.addr %s178, 64
          %s180 = scalar_lea.vmem [#allocation8], %s179
          %s182 = ssub.s32 1024, 1024
          %183 = vsyncadd %s177, %s182
          %s184 = smul.addr %s13, 16
          %s185 = smul.addr %s184, 64
          %s186 = scalar_lea.hbm %s2, %s185
          %s187 = sshll.u32 %s180, 4
          %s188 = int_to_ptr.vmem [resolvable:$true] %s187
          %193 = dma.hbm_to_vmem [thread:$0]  %s186, 1024, %s188, %s177, 64, 64, 4
        $region28: #{tpu_custom_call.1} parent=23 // pred_fallthru
          _
        // Predicated region
        $region29: #{tpu_custom_call.1} parent=23 // pred_check
          %p194 = pneg %p101
        $region30: #{tpu_custom_call.1} parent=23 // pred_check_branch
          %196 = sbr.rel (%p194) target = $region32
        $region31: #{tpu_custom_call.1} parent=23 // pred_region
          %p197 = scmp.lt.s32.totalorder %s13, 2
          %s198 = scalar_select %p197, %s13, 2
          %s199 = scalar_lea.vmem %s3, %s198
        $region32: #{tpu_custom_call.1} parent=23 // pred_fallthru
          _
      $region24: #{tpu_custom_call.1} parent=5 // pred_fallthru
        _
      %p200 = scmp.le.s32.totalorder 1, %s13
      %p201 = scmp.lt.s32.totalorder %s13, 4
      %p202 = pnand %p200, %p201
      %p203 = pneg %p202
      // Predicated region
      $region33: #{tpu_custom_call.1} parent=5 // pred_check
        _
      $region34: #{tpu_custom_call.1} parent=5 // pred_check_branch
        %205 = sbr.rel (%p202) target = $region36
      $region35: #{tpu_custom_call.1} parent=5 // pred_region
        %s206 = ssub.s32 %s13, 1
        // Predicated region
        $region37: #{tpu_custom_call.1} parent=35 // pred_check
          %p207 = pneg %p34
        $region38: #{tpu_custom_call.1} parent=35 // pred_check_branch
          %209 = sbr.rel (%p207) target = $region40
        $region39: #{tpu_custom_call.1} parent=35 // pred_region
          %210 = dma.done [#allocation4], 4096
        $region40: #{tpu_custom_call.1} parent=35 // pred_fallthru
          _
        // Predicated region
        $region41: #{tpu_custom_call.1} parent=35 // pred_check
          %p211 = pneg %p55
        $region42: #{tpu_custom_call.1} parent=35 // pred_check_branch
          %213 = sbr.rel (%p211) target = $region44
        $region43: #{tpu_custom_call.1} parent=35 // pred_region
          %214 = dma.done [#allocation7], 2048
        $region44: #{tpu_custom_call.1} parent=35 // pred_fallthru
          _
        %s215 = sand.u32 %s18, 1
        %s216 = scalar_lea.sflag [#allocation4], %s215
        %s217 = sand.u32 %s68, 1
        %s218 = smul.addr %s217, 64
        %s219 = scalar_lea.vmem [#allocation8], %s218
        // Predicated region
        $region45: #{tpu_custom_call.1} parent=35 // pred_check
          %p220 = pneg %p81
        $region46: #{tpu_custom_call.1} parent=35 // pred_check_branch
          %222 = sbr.rel (%p220) target = $region48
        $region47: #{tpu_custom_call.1} parent=35 // pred_region
          %223 = dma.done %s216, 1024
        $region48: #{tpu_custom_call.1} parent=35 // pred_fallthru
          _
        %p224 = pneg %p34
        %p225 = pneg %p31
        %p226 = pneg %p55
        %p227 = pneg %p52
        %s228 = sand.u32 %s18, 1
        %s229 = scalar_lea.sflag [#allocation4], %s228
        %s230 = sand.u32 %s68, 1
        %s231 = smul.addr %s230, 64
        %s232 = scalar_lea.vmem [#allocation8], %s231
        %p233 = pneg %p81
        %p234 = pneg %p78
        %p235 = scmp.lt.s32.totalorder %s18, 2
        %s236 = scalar_select %p235, %s18, 2
        %s237 = scalar_lea.vmem %s3, %s236
        %p238 = pneg %p107
        %p239 = pneg %p104
        %p240 = pneg %p128
        %p241 = pneg %p125
        %p242 = scmp.lt.s32.totalorder %s18, 2
        %s243 = scalar_select %p242, %s18, 2
        %s244 = scalar_lea.vmem %s3, %s243
        %p246 = scmp.eq.s32.totalorder %s18, 0
        // Predicated region
        $region49: #{tpu_custom_call.1} parent=35 // pred_check
          %p247 = pneg %p246
        $region50: #{tpu_custom_call.1} parent=35 // pred_check_branch
          %249 = sbr.rel (%p247) target = $region52
        $region51: #{tpu_custom_call.1} parent=35 // pred_region
          %v250 = vld [vmem:[#allocation6] sm:$0xf]
          %v251 = vld [vmem:[#allocation6 + $0x4] sm:$0xf]
          %v252 = vld [vmem:[#allocation6 + $0x8] sm:$0xf]
          %v253 = vld [vmem:[#allocation6 + $0xc] sm:$0xf]
          %v254 = vld [vmem:[#allocation6 + $0x10] sm:$0xf]
          %v255 = vld [vmem:[#allocation6 + $0x14] sm:$0xf]
          %v256 = vld [vmem:[#allocation6 + $0x18] sm:$0xf]
          %v257 = vld [vmem:[#allocation6 + $0x1c] sm:$0xf]
          %v258 = vld [vmem:[#allocation6 + $0x20] sm:$0xf]
          %v259 = vld [vmem:[#allocation6 + $0x24] sm:$0xf]
          %v260 = vld [vmem:[#allocation6 + $0x28] sm:$0xf]
          %v261 = vld [vmem:[#allocation6 + $0x2c] sm:$0xf]
          %v262 = vld [vmem:[#allocation6 + $0x30] sm:$0xf]
          %v263 = vld [vmem:[#allocation6 + $0x34] sm:$0xf]
          %v264 = vld [vmem:[#allocation6 + $0x38] sm:$0xf]
          %v265 = vld [vmem:[#allocation6 + $0x3c] sm:$0xf]
          %v266 = vld [vmem:[#allocation6 + $0x40] sm:$0xf]
          %v267 = vld [vmem:[#allocation6 + $0x44] sm:$0xf]
          %v268 = vld [vmem:[#allocation6 + $0x48] sm:$0xf]
          %v269 = vld [vmem:[#allocation6 + $0x4c] sm:$0xf]
          %v270 = vld [vmem:[#allocation6 + $0x50] sm:$0xf]
          %v271 = vld [vmem:[#allocation6 + $0x54] sm:$0xf]
          %v272 = vld [vmem:[#allocation6 + $0x58] sm:$0xf]
          %v273 = vld [vmem:[#allocation6 + $0x5c] sm:$0xf]
          %v274 = vld [vmem:[#allocation6 + $0x60] sm:$0xf]
          %v275 = vld [vmem:[#allocation6 + $0x64] sm:$0xf]
          %v276 = vld [vmem:[#allocation6 + $0x68] sm:$0xf]
          %v277 = vld [vmem:[#allocation6 + $0x6c] sm:$0xf]
          %v278 = vld [vmem:[#allocation6 + $0x70] sm:$0xf]
          %v279 = vld [vmem:[#allocation6 + $0x74] sm:$0xf]
          %v280 = vld [vmem:[#allocation6 + $0x78] sm:$0xf]
          %v281 = vld [vmem:[#allocation6 + $0x7c] sm:$0xf]
          %v314 = vunpack.c.l.b16 %v250
          %v315 = vunpack.c.l.b16 %v251
          %v316 = vunpack.c.l.b16 %v252
          %v317 = vunpack.c.l.b16 %v253
          %v318 = vunpack.c.l.b16 %v254
          %v319 = vunpack.c.l.b16 %v255
          %v320 = vunpack.c.l.b16 %v256
          %v321 = vunpack.c.l.b16 %v257
          %v322 = vunpack.c.l.b16 %v258
          %v323 = vunpack.c.l.b16 %v259
          %v324 = vunpack.c.l.b16 %v260
          %v325 = vunpack.c.l.b16 %v261
          %v326 = vunpack.c.l.b16 %v262
          %v327 = vunpack.c.l.b16 %v263
          %v328 = vunpack.c.l.b16 %v264
          %v329 = vunpack.c.l.b16 %v265
          %v330 = vunpack.c.l.b16 %v266
          %v331 = vunpack.c.l.b16 %v267
          %v332 = vunpack.c.l.b16 %v268
          %v333 = vunpack.c.l.b16 %v269
          %v334 = vunpack.c.l.b16 %v270
          %v335 = vunpack.c.l.b16 %v271
          %v336 = vunpack.c.l.b16 %v272
          %v337 = vunpack.c.l.b16 %v273
          %v338 = vunpack.c.l.b16 %v274
          %v339 = vunpack.c.l.b16 %v275
          %v340 = vunpack.c.l.b16 %v276
          %v341 = vunpack.c.l.b16 %v277
          %v342 = vunpack.c.l.b16 %v278
          %v343 = vunpack.c.l.b16 %v279
          %v344 = vunpack.c.l.b16 %v280
          %v345 = vunpack.c.l.b16 %v281
          %v346 = vpack.c.b16 %v315, %v314
          %v347 = vpack.c.b16 %v317, %v316
          %v348 = vpack.c.b16 %v319, %v318
          %v349 = vpack.c.b16 %v321, %v320
          %v350 = vpack.c.b16 %v323, %v322
          %v351 = vpack.c.b16 %v325, %v324
          %v352 = vpack.c.b16 %v327, %v326
          %v353 = vpack.c.b16 %v329, %v328
          %v354 = vpack.c.b16 %v331, %v330
          %v355 = vpack.c.b16 %v333, %v332
          %v356 = vpack.c.b16 %v335, %v334
          %v357 = vpack.c.b16 %v337, %v336
          %v358 = vpack.c.b16 %v339, %v338
          %v359 = vpack.c.b16 %v341, %v340
          %v360 = vpack.c.b16 %v343, %v342
          %v361 = vpack.c.b16 %v345, %v344
          %378 = vst [vmem:[#allocation2] sm:$0xff] %v346
          %379 = vst [vmem:[#allocation2 + $0x8] sm:$0xff] %v347
          %380 = vst [vmem:[#allocation2 + $0x10] sm:$0xff] %v348
          %381 = vst [vmem:[#allocation2 + $0x18] sm:$0xff] %v349
          %382 = vst [vmem:[#allocation2 + $0x20] sm:$0xff] %v350
          %383 = vst [vmem:[#allocation2 + $0x28] sm:$0xff] %v351
          %384 = vst [vmem:[#allocation2 + $0x30] sm:$0xff] %v352
          %385 = vst [vmem:[#allocation2 + $0x38] sm:$0xff] %v353
          %386 = vst [vmem:[#allocation2 + $0x40] sm:$0xff] %v354
          %387 = vst [vmem:[#allocation2 + $0x48] sm:$0xff] %v355
          %388 = vst [vmem:[#allocation2 + $0x50] sm:$0xff] %v356
          %389 = vst [vmem:[#allocation2 + $0x58] sm:$0xff] %v357
          %390 = vst [vmem:[#allocation2 + $0x60] sm:$0xff] %v358
          %391 = vst [vmem:[#allocation2 + $0x68] sm:$0xff] %v359
          %392 = vst [vmem:[#allocation2 + $0x70] sm:$0xff] %v360
          %393 = vst [vmem:[#allocation2 + $0x78] sm:$0xff] %v361
        $region52: #{tpu_custom_call.1} parent=35 // pred_fallthru
          _
        %v394 = vld [vmem:[#allocation3] sm:$0xff]
        %v395 = vld [vmem:[#allocation3 + $0x8] sm:$0xff]
        %v396 = vld [vmem:[#allocation3 + $0x10] sm:$0xff]
        %v397 = vld [vmem:[#allocation3 + $0x18] sm:$0xff]
        %v398 = vld [vmem:[#allocation3 + $0x20] sm:$0xff]
        %v399 = vld [vmem:[#allocation3 + $0x28] sm:$0xff]
        %v400 = vld [vmem:[#allocation3 + $0x30] sm:$0xff]
        %v401 = vld [vmem:[#allocation3 + $0x38] sm:$0xff]
        %v402 = vld [vmem:[#allocation3 + $0x40] sm:$0xff]
        %v403 = vld [vmem:[#allocation3 + $0x48] sm:$0xff]
        %v404 = vld [vmem:[#allocation3 + $0x50] sm:$0xff]
        %v405 = vld [vmem:[#allocation3 + $0x58] sm:$0xff]
        %v406 = vld [vmem:[#allocation3 + $0x60] sm:$0xff]
        %v407 = vld [vmem:[#allocation3 + $0x68] sm:$0xff]
        %v408 = vld [vmem:[#allocation3 + $0x70] sm:$0xff]
        %v409 = vld [vmem:[#allocation3 + $0x78] sm:$0xff]
        %v410 = vld [vmem:[#allocation3 + $0x80] sm:$0xff]
        %v411 = vld [vmem:[#allocation3 + $0x88] sm:$0xff]
        %v412 = vld [vmem:[#allocation3 + $0x90] sm:$0xff]
        %v413 = vld [vmem:[#allocation3 + $0x98] sm:$0xff]
        %v414 = vld [vmem:[#allocation3 + $0xa0] sm:$0xff]
        %v415 = vld [vmem:[#allocation3 + $0xa8] sm:$0xff]
        %v416 = vld [vmem:[#allocation3 + $0xb0] sm:$0xff]
        %v417 = vld [vmem:[#allocation3 + $0xb8] sm:$0xff]
        %v418 = vld [vmem:[#allocation3 + $0xc0] sm:$0xff]
        %v419 = vld [vmem:[#allocation3 + $0xc8] sm:$0xff]
        %v420 = vld [vmem:[#allocation3 + $0xd0] sm:$0xff]
        %v421 = vld [vmem:[#allocation3 + $0xd8] sm:$0xff]
        %v422 = vld [vmem:[#allocation3 + $0xe0] sm:$0xff]
        %v423 = vld [vmem:[#allocation3 + $0xe8] sm:$0xff]
        %v424 = vld [vmem:[#allocation3 + $0xf0] sm:$0xff]
        %v425 = vld [vmem:[#allocation3 + $0xf8] sm:$0xff]
        %v426 = vld [vmem:[#allocation2] sm:$0xff]
        %v427 = vld [vmem:[#allocation2 + $0x8] sm:$0xff]
        %v428 = vld [vmem:[#allocation2 + $0x10] sm:$0xff]
        %v429 = vld [vmem:[#allocation2 + $0x18] sm:$0xff]
        %v430 = vld [vmem:[#allocation2 + $0x20] sm:$0xff]
        %v431 = vld [vmem:[#allocation2 + $0x28] sm:$0xff]
        %v432 = vld [vmem:[#allocation2 + $0x30] sm:$0xff]
        %v433 = vld [vmem:[#allocation2 + $0x38] sm:$0xff]
        %v434 = vld [vmem:[#allocation2 + $0x40] sm:$0xff]
        %v435 = vld [vmem:[#allocation2 + $0x48] sm:$0xff]
        %v436 = vld [vmem:[#allocation2 + $0x50] sm:$0xff]
        %v437 = vld [vmem:[#allocation2 + $0x58] sm:$0xff]
        %v438 = vld [vmem:[#allocation2 + $0x60] sm:$0xff]
        %v439 = vld [vmem:[#allocation2 + $0x68] sm:$0xff]
        %v440 = vld [vmem:[#allocation2 + $0x70] sm:$0xff]
        %v441 = vld [vmem:[#allocation2 + $0x78] sm:$0xff]
        %v474 = vunpack.c.l.b16 %v394
        %v475 = vunpack.c.h.b16 %v394
        %v476 = vunpack.c.l.b16 %v395
        %v477 = vunpack.c.h.b16 %v395
        %v478 = vunpack.c.l.b16 %v396
        %v479 = vunpack.c.h.b16 %v396
        %v480 = vunpack.c.l.b16 %v397
        %v481 = vunpack.c.h.b16 %v397
        %v482 = vunpack.c.l.b16 %v398
        %v483 = vunpack.c.h.b16 %v398
        %v484 = vunpack.c.l.b16 %v399
        %v485 = vunpack.c.h.b16 %v399
        %v486 = vunpack.c.l.b16 %v400
        %v487 = vunpack.c.h.b16 %v400
        %v488 = vunpack.c.l.b16 %v401
        %v489 = vunpack.c.h.b16 %v401
        %v490 = vunpack.c.l.b16 %v402
        %v491 = vunpack.c.h.b16 %v402
        %v492 = vunpack.c.l.b16 %v403
        %v493 = vunpack.c.h.b16 %v403
        %v494 = vunpack.c.l.b16 %v404
        %v495 = vunpack.c.h.b16 %v404
        %v496 = vunpack.c.l.b16 %v405
        %v497 = vunpack.c.h.b16 %v405
        %v498 = vunpack.c.l.b16 %v406
        %v499 = vunpack.c.h.b16 %v406
        %v500 = vunpack.c.l.b16 %v407
        %v501 = vunpack.c.h.b16 %v407
        %v502 = vunpack.c.l.b16 %v408
        %v503 = vunpack.c.h.b16 %v408
        %v504 = vunpack.c.l.b16 %v409
        %v505 = vunpack.c.h.b16 %v409
        %v506 = vunpack.c.l.b16 %v410
        %v507 = vunpack.c.h.b16 %v410
        %v508 = vunpack.c.l.b16 %v411
        %v509 = vunpack.c.h.b16 %v411
        %v510 = vunpack.c.l.b16 %v412
        %v511 = vunpack.c.h.b16 %v412
        %v512 = vunpack.c.l.b16 %v413
        %v513 = vunpack.c.h.b16 %v413
        %v514 = vunpack.c.l.b16 %v414
        %v515 = vunpack.c.h.b16 %v414
        %v516 = vunpack.c.l.b16 %v415
        %v517 = vunpack.c.h.b16 %v415
        %v518 = vunpack.c.l.b16 %v416
        %v519 = vunpack.c.h.b16 %v416
        %v520 = vunpack.c.l.b16 %v417
        %v521 = vunpack.c.h.b16 %v417
        %v522 = vunpack.c.l.b16 %v418
        %v523 = vunpack.c.h.b16 %v418
        %v524 = vunpack.c.l.b16 %v419
        %v525 = vunpack.c.h.b16 %v419
        %v526 = vunpack.c.l.b16 %v420
        %v527 = vunpack.c.h.b16 %v420
        %v528 = vunpack.c.l.b16 %v421
        %v529 = vunpack.c.h.b16 %v421
        %v530 = vunpack.c.l.b16 %v422
        %v531 = vunpack.c.h.b16 %v422
        %v532 = vunpack.c.l.b16 %v423
        %v533 = vunpack.c.h.b16 %v423
        %v534 = vunpack.c.l.b16 %v424
        %v535 = vunpack.c.h.b16 %v424
        %v536 = vunpack.c.l.b16 %v425
        %v537 = vunpack.c.h.b16 %v425
        %v538 = vpack.c.b16 %v476, %v474
        %v539 = vpack.c.b16 %v477, %v475
        %v540 = vpack.c.b16 %v480, %v478
        %v541 = vpack.c.b16 %v481, %v479
        %v542 = vpack.c.b16 %v484, %v482
        %v543 = vpack.c.b16 %v485, %v483
        %v544 = vpack.c.b16 %v488, %v486
        %v545 = vpack.c.b16 %v489, %v487
        %v546 = vpack.c.b16 %v492, %v490
        %v547 = vpack.c.b16 %v493, %v491
        %v548 = vpack.c.b16 %v496, %v494
        %v549 = vpack.c.b16 %v497, %v495
        %v550 = vpack.c.b16 %v500, %v498
        %v551 = vpack.c.b16 %v501, %v499
        %v552 = vpack.c.b16 %v504, %v502
        %v553 = vpack.c.b16 %v505, %v503
        %v554 = vpack.c.b16 %v508, %v506
        %v555 = vpack.c.b16 %v509, %v507
        %v556 = vpack.c.b16 %v512, %v510
        %v557 = vpack.c.b16 %v513, %v511
        %v558 = vpack.c.b16 %v516, %v514
        %v559 = vpack.c.b16 %v517, %v515
        %v560 = vpack.c.b16 %v520, %v518
        %v561 = vpack.c.b16 %v521, %v519
        %v562 = vpack.c.b16 %v524, %v522
        %v563 = vpack.c.b16 %v525, %v523
        %v564 = vpack.c.b16 %v528, %v526
        %v565 = vpack.c.b16 %v529, %v527
        %v566 = vpack.c.b16 %v532, %v530
        %v567 = vpack.c.b16 %v533, %v531
        %v568 = vpack.c.b16 %v536, %v534
        %v569 = vpack.c.b16 %v537, %v535
        %602 = vmatprep.subr.bf16.mxu0 0
        %603 = vmatpush1.bf16.msra.mxu0 %v426
        %604 = vmatprep.subr.bf16.mxu0 0
        %605 = vmatpush1.bf16.msra.mxu0 %v427
        %606 = vmatprep.subr.bf16.mxu0 0
        %607 = vmatpush1.bf16.msra.mxu0 %v428
        %608 = vmatprep.subr.bf16.mxu0 0
        %609 = vmatpush1.bf16.msra.mxu0 %v429
        %610 = vmatprep.subr.bf16.mxu0 0
        %611 = vmatpush1.bf16.msra.mxu0 %v430
        %612 = vmatprep.subr.bf16.mxu0 0
        %613 = vmatpush1.bf16.msra.mxu0 %v431
        %614 = vmatprep.subr.bf16.mxu0 0
        %615 = vmatpush1.bf16.msra.mxu0 %v432
        %616 = vmatprep.subr.bf16.mxu0 0
        %617 = vmatpush1.bf16.msra.mxu0 %v433
        %618 = vmatprep.subr.bf16.mxu0 0
        %619 = vmatpush1.bf16.msra.mxu0 %v434
        %620 = vmatprep.subr.bf16.mxu0 0
        %621 = vmatpush1.bf16.msra.mxu0 %v435
        %622 = vmatprep.subr.bf16.mxu0 0
        %623 = vmatpush1.bf16.msra.mxu0 %v436
        %624 = vmatprep.subr.bf16.mxu0 0
        %625 = vmatpush1.bf16.msra.mxu0 %v437
        %626 = vmatprep.subr.bf16.mxu0 0
        %627 = vmatpush1.bf16.msra.mxu0 %v438
        %628 = vmatprep.subr.bf16.mxu0 0
        %629 = vmatpush1.bf16.msra.mxu0 %v439
        %630 = vmatprep.subr.bf16.mxu0 0
        %631 = vmatpush1.bf16.msra.mxu0 %v440
        %632 = vmatprep.subr.bf16.mxu0 0
        %633 = vmatpush1.bf16.msra.mxu0 %v441
        %634 = vmatprep.mubr.bf16.mxu0 %v539
        %635 = vmatmul.mubr.bf16.gmra.mrb[0].mxu0 %v538
        %v636 = vpop.f32.mrb[0].mxu0
        %v637 = vadd.f32 0.0, %v636
        %v638 = vpop.f32.mrb[0].mxu0
        %v639 = vpop.f32.mrb[0].mxu0
        %v640 = vadd.f32 0.0, %v639
        %v641 = vpop.f32.mrb[0].mxu0
        %642 = vmatprep.mubr.bf16.mxu0 %v541
        %643 = vmatmul.mubr.bf16.gmra.mrb[0].mxu0 %v540
        %v644 = vpop.f32.mrb[0].mxu0
        %v645 = vadd.f32 0.0, %v644
        %v646 = vpop.f32.mrb[0].mxu0
        %v647 = vpop.f32.mrb[0].mxu0
        %v648 = vadd.f32 0.0, %v647
        %v649 = vpop.f32.mrb[0].mxu0
        %650 = vmatprep.mubr.bf16.mxu0 %v543
        %651 = vmatmul.mubr.bf16.gmra.mrb[0].mxu0 %v542
        %v652 = vpop.f32.mrb[0].mxu0
        %v653 = vadd.f32 0.0, %v652
        %v654 = vpop.f32.mrb[0].mxu0
        %v655 = vpop.f32.mrb[0].mxu0
        %v656 = vadd.f32 0.0, %v655
        %v657 = vpop.f32.mrb[0].mxu0
        %658 = vmatprep.mubr.bf16.mxu0 %v545
        %659 = vmatmul.mubr.bf16.gmra.mrb[0].mxu0 %v544
        %v660 = vpop.f32.mrb[0].mxu0
        %v661 = vadd.f32 0.0, %v660
        %v662 = vpop.f32.mrb[0].mxu0
        %v663 = vpop.f32.mrb[0].mxu0
        %v664 = vadd.f32 0.0, %v663
        %v665 = vpop.f32.mrb[0].mxu0
        %666 = vmatprep.mubr.bf16.mxu0 %v547
        %667 = vmatmul.mubr.bf16.gmra.mrb[0].mxu0 %v546
        %v668 = vpop.f32.mrb[0].mxu0
        %v669 = vadd.f32 0.0, %v668
        %v670 = vpop.f32.mrb[0].mxu0
        %v671 = vpop.f32.mrb[0].mxu0
        %v672 = vadd.f32 0.0, %v671
        %v673 = vpop.f32.mrb[0].mxu0
        %674 = vmatprep.mubr.bf16.mxu0 %v549
        %675 = vmatmul.mubr.bf16.gmra.mrb[0].mxu0 %v548
        %v676 = vpop.f32.mrb[0].mxu0
        %v677 = vadd.f32 0.0, %v676
        %v678 = vpop.f32.mrb[0].mxu0
        %v679 = vpop.f32.mrb[0].mxu0
        %v680 = vadd.f32 0.0, %v679
        %v681 = vpop.f32.mrb[0].mxu0
        %682 = vmatprep.mubr.bf16.mxu0 %v551
        %683 = vmatmul.mubr.bf16.gmra.mrb[0].mxu0 %v550
        %v684 = vpop.f32.mrb[0].mxu0
        %v685 = vadd.f32 0.0, %v684
        %v686 = vpop.f32.mrb[0].mxu0
        %v687 = vpop.f32.mrb[0].mxu0
        %v688 = vadd.f32 0.0, %v687
        %v689 = vpop.f32.mrb[0].mxu0
        %690 = vmatprep.mubr.bf16.mxu0 %v553
        %691 = vmatmul.mubr.bf16.gmra.mrb[0].mxu0 %v552
        %v692 = vpop.f32.mrb[0].mxu0
        %v693 = vadd.f32 0.0, %v692
        %v694 = vpop.f32.mrb[0].mxu0
        %v695 = vpop.f32.mrb[0].mxu0
        %v696 = vadd.f32 0.0, %v695
        %v697 = vpop.f32.mrb[0].mxu0
        %698 = vmatprep.mubr.bf16.mxu0 %v555
        %699 = vmatmul.mubr.bf16.gmra.mrb[0].mxu0 %v554
        %v700 = vpop.f32.mrb[0].mxu0
        %v701 = vadd.f32 0.0, %v700
        %v702 = vpop.f32.mrb[0].mxu0
        %v703 = vpop.f32.mrb[0].mxu0
        %v704 = vadd.f32 0.0, %v703
        %v705 = vpop.f32.mrb[0].mxu0
        %706 = vmatprep.mubr.bf16.mxu0 %v557
        %707 = vmatmul.mubr.bf16.gmra.mrb[0].mxu0 %v556
        %v708 = vpop.f32.mrb[0].mxu0
        %v709 = vadd.f32 0.0, %v708
        %v710 = vpop.f32.mrb[0].mxu0
        %v711 = vpop.f32.mrb[0].mxu0
        %v712 = vadd.f32 0.0, %v711
        %v713 = vpop.f32.mrb[0].mxu0
        %714 = vmatprep.mubr.bf16.mxu0 %v559
        %715 = vmatmul.mubr.bf16.gmra.mrb[0].mxu0 %v558
        %v716 = vpop.f32.mrb[0].mxu0
        %v717 = vadd.f32 0.0, %v716
        %v718 = vpop.f32.mrb[0].mxu0
        %v719 = vpop.f32.mrb[0].mxu0
        %v720 = vadd.f32 0.0, %v719
        %v721 = vpop.f32.mrb[0].mxu0
        %722 = vmatprep.mubr.bf16.mxu0 %v561
        %723 = vmatmul.mubr.bf16.gmra.mrb[0].mxu0 %v560
        %v724 = vpop.f32.mrb[0].mxu0
        %v725 = vadd.f32 0.0, %v724
        %v726 = vpop.f32.mrb[0].mxu0
        %v727 = vpop.f32.mrb[0].mxu0
        %v728 = vadd.f32 0.0, %v727
        %v729 = vpop.f32.mrb[0].mxu0
        %730 = vmatprep.mubr.bf16.mxu0 %v563
        %731 = vmatmul.mubr.bf16.gmra.mrb[0].mxu0 %v562
        %v732 = vpop.f32.mrb[0].mxu0
        %v733 = vadd.f32 0.0, %v732
        %v734 = vpop.f32.mrb[0].mxu0
        %v735 = vpop.f32.mrb[0].mxu0
        %v736 = vadd.f32 0.0, %v735
        %v737 = vpop.f32.mrb[0].mxu0
        %738 = vmatprep.mubr.bf16.mxu0 %v565
        %739 = vmatmul.mubr.bf16.gmra.mrb[0].mxu0 %v564
        %v740 = vpop.f32.mrb[0].mxu0
        %v741 = vadd.f32 0.0, %v740
        %v742 = vpop.f32.mrb[0].mxu0
        %v743 = vpop.f32.mrb[0].mxu0
        %v744 = vadd.f32 0.0, %v743
        %v745 = vpop.f32.mrb[0].mxu0
        %746 = vmatprep.mubr.bf16.mxu0 %v567
        %747 = vmatmul.mubr.bf16.gmra.mrb[0].mxu0 %v566
        %v748 = vpop.f32.mrb[0].mxu0
        %v749 = vadd.f32 0.0, %v748
        %v750 = vpop.f32.mrb[0].mxu0
        %v751 = vpop.f32.mrb[0].mxu0
        %v752 = vadd.f32 0.0, %v751
        %v753 = vpop.f32.mrb[0].mxu0
        %754 = vmatprep.mubr.bf16.mxu0 %v569
        %755 = vmatmul.mubr.bf16.gmra.mrb[0].mxu0 %v568
        %v756 = vpop.f32.mrb[0].mxu0
        %v757 = vadd.f32 0.0, %v756
        %v758 = vpop.f32.mrb[0].mxu0
        %v759 = vpop.f32.mrb[0].mxu0
        %v760 = vadd.f32 0.0, %v759
        %v761 = vpop.f32.mrb[0].mxu0
        %762 = vdwg.mxu0
        %v763 = vpack.c.bf16 %v640, %v637
        %v764 = vpack.c.bf16 %v648, %v645
        %v765 = vpack.c.bf16 %v656, %v653
        %v766 = vpack.c.bf16 %v664, %v661
        %v767 = vpack.c.bf16 %v672, %v669
        %v768 = vpack.c.bf16 %v680, %v677
        %v769 = vpack.c.bf16 %v688, %v685
        %v770 = vpack.c.bf16 %v696, %v693
        %v771 = vpack.c.bf16 %v704, %v701
        %v772 = vpack.c.bf16 %v712, %v709
        %v773 = vpack.c.bf16 %v720, %v717
        %v774 = vpack.c.bf16 %v728, %v725
        %v775 = vpack.c.bf16 %v736, %v733
        %v776 = vpack.c.bf16 %v744, %v741
        %v777 = vpack.c.bf16 %v752, %v749
        %v778 = vpack.c.bf16 %v760, %v757
        %v779 = vld [vmem:[%s219] sm:$0xf]
        %v780 = vld [vmem:[%s219 + $0x4] sm:$0xf]
        %v781 = vld [vmem:[%s219 + $0x8] sm:$0xf]
        %v782 = vld [vmem:[%s219 + $0xc] sm:$0xf]
        %v783 = vld [vmem:[%s219 + $0x10] sm:$0xf]
        %v784 = vld [vmem:[%s219 + $0x14] sm:$0xf]
        %v785 = vld [vmem:[%s219 + $0x18] sm:$0xf]
        %v786 = vld [vmem:[%s219 + $0x1c] sm:$0xf]
        %v787 = vld [vmem:[%s219 + $0x20] sm:$0xf]
        %v788 = vld [vmem:[%s219 + $0x24] sm:$0xf]
        %v789 = vld [vmem:[%s219 + $0x28] sm:$0xf]
        %v790 = vld [vmem:[%s219 + $0x2c] sm:$0xf]
        %v791 = vld [vmem:[%s219 + $0x30] sm:$0xf]
        %v792 = vld [vmem:[%s219 + $0x34] sm:$0xf]
        %v793 = vld [vmem:[%s219 + $0x38] sm:$0xf]
        %v794 = vld [vmem:[%s219 + $0x3c] sm:$0xf]
        %v795 = vld [vmem:[%s244] sm:$0x1]
        %v797 = vlaneseq
        %v798 = vshrl.u32 %v797, 7
        %v799 = vsub.s32 0, %v798
        %v800 = vrot.slane %v795, %v799
        %v818 = vunpack.c.l.b16 %v779
        %v819 = vunpack.c.l.b16 %v780
        %v820 = vunpack.c.l.b16 %v781
        %v821 = vunpack.c.l.b16 %v782
        %v822 = vunpack.c.l.b16 %v783
        %v823 = vunpack.c.l.b16 %v784
        %v824 = vunpack.c.l.b16 %v785
        %v825 = vunpack.c.l.b16 %v786
        %v826 = vunpack.c.l.b16 %v787
        %v827 = vunpack.c.l.b16 %v788
        %v828 = vunpack.c.l.b16 %v789
        %v829 = vunpack.c.l.b16 %v790
        %v830 = vunpack.c.l.b16 %v791
        %v831 = vunpack.c.l.b16 %v792
        %v832 = vunpack.c.l.b16 %v793
        %v833 = vunpack.c.l.b16 %v794
        %v834 = vpack.c.b16 %v819, %v818
        %v835 = vpack.c.b16 %v821, %v820
        %v836 = vpack.c.b16 %v823, %v822
        %v837 = vpack.c.b16 %v825, %v824
        %v838 = vpack.c.b16 %v827, %v826
        %v839 = vpack.c.b16 %v829, %v828
        %v840 = vpack.c.b16 %v831, %v830
        %v841 = vpack.c.b16 %v833, %v832
        %850 = vmatprep.subr.bf16.mxu0 0
        %851 = vmatpush1.bf16.msra.mxu0 %v834
        %852 = vmatprep.subr.bf16.mxu0 0
        %853 = vmatpush1.bf16.msra.mxu0 %v835
        %854 = vmatprep.subr.bf16.mxu0 0
        %855 = vmatpush1.bf16.msra.mxu0 %v836
        %856 = vmatprep.subr.bf16.mxu0 0
        %857 = vmatpush1.bf16.msra.mxu0 %v837
        %858 = vmatprep.subr.bf16.mxu0 0
        %859 = vmatpush1.bf16.msra.mxu0 %v838
        %860 = vmatprep.subr.bf16.mxu0 0
        %861 = vmatpush1.bf16.msra.mxu0 %v839
        %862 = vmatprep.subr.bf16.mxu0 0
        %863 = vmatpush1.bf16.msra.mxu0 %v840
        %864 = vmatprep.subr.bf16.mxu0 0
        %865 = vmatpush1.bf16.msra.mxu0 %v841
        %866 = vmatprep.subr.bf16.mxu0 0
        %867 = vmatpush1.bf16.msra.mxu0 0
        %868 = vmatprep.subr.bf16.mxu0 0
        %869 = vmatpush1.bf16.msra.mxu0 0
        %870 = vmatprep.subr.bf16.mxu0 0
        %871 = vmatpush1.bf16.msra.mxu0 0
        %872 = vmatprep.subr.bf16.mxu0 0
        %873 = vmatpush1.bf16.msra.mxu0 0
        %874 = vmatprep.subr.bf16.mxu0 0
        %875 = vmatpush1.bf16.msra.mxu0 0
        %876 = vmatprep.subr.bf16.mxu0 0
        %877 = vmatpush1.bf16.msra.mxu0 0
        %878 = vmatprep.subr.bf16.mxu0 0
        %879 = vmatpush1.bf16.msra.mxu0 0
        %880 = vmatprep.subr.bf16.mxu0 0
        %881 = vmatpush1.bf16.msra.mxu0 0
        %882 = vmatprep.mubr.bf16.mxu0 0
        %883 = vmatmul.mubr.bf16.gmra.mrb[0].mxu0 %v763
        %v884 = vpop.f32.mrb[0].mxu0
        %v885 = vadd.f32 %v800, %v884
        %v886 = vpop.f32.mrb[0].mxu0
        %v887 = vpop.f32.mrb[0].mxu0
        %v888 = vadd.f32 %v800, %v887
        %v889 = vpop.f32.mrb[0].mxu0
        %890 = vmatprep.mubr.bf16.mxu0 0
        %891 = vmatmul.mubr.bf16.gmra.mrb[0].mxu0 %v764
        %v892 = vpop.f32.mrb[0].mxu0
        %v893 = vadd.f32 %v800, %v892
        %v894 = vpop.f32.mrb[0].mxu0
        %v895 = vpop.f32.mrb[0].mxu0
        %v896 = vadd.f32 %v800, %v895
        %v897 = vpop.f32.mrb[0].mxu0
        %898 = vmatprep.mubr.bf16.mxu0 0
        %899 = vmatmul.mubr.bf16.gmra.mrb[0].mxu0 %v765
        %v900 = vpop.f32.mrb[0].mxu0
        %v901 = vadd.f32 %v800, %v900
        %v902 = vpop.f32.mrb[0].mxu0
        %v903 = vpop.f32.mrb[0].mxu0
        %v904 = vadd.f32 %v800, %v903
        %v905 = vpop.f32.mrb[0].mxu0
        %906 = vmatprep.mubr.bf16.mxu0 0
        %907 = vmatmul.mubr.bf16.gmra.mrb[0].mxu0 %v766
        %v908 = vpop.f32.mrb[0].mxu0
        %v909 = vadd.f32 %v800, %v908
        %v910 = vpop.f32.mrb[0].mxu0
        %v911 = vpop.f32.mrb[0].mxu0
        %v912 = vadd.f32 %v800, %v911
        %v913 = vpop.f32.mrb[0].mxu0
        %914 = vmatprep.mubr.bf16.mxu0 0
        %915 = vmatmul.mubr.bf16.gmra.mrb[0].mxu0 %v767
        %v916 = vpop.f32.mrb[0].mxu0
        %v917 = vadd.f32 %v800, %v916
        %v918 = vpop.f32.mrb[0].mxu0
        %v919 = vpop.f32.mrb[0].mxu0
        %v920 = vadd.f32 %v800, %v919
        %v921 = vpop.f32.mrb[0].mxu0
        %922 = vmatprep.mubr.bf16.mxu0 0
        %923 = vmatmul.mubr.bf16.gmra.mrb[0].mxu0 %v768
        %v924 = vpop.f32.mrb[0].mxu0
        %v925 = vadd.f32 %v800, %v924
        %v926 = vpop.f32.mrb[0].mxu0
        %v927 = vpop.f32.mrb[0].mxu0
        %v928 = vadd.f32 %v800, %v927
        %v929 = vpop.f32.mrb[0].mxu0
        %930 = vmatprep.mubr.bf16.mxu0 0
        %931 = vmatmul.mubr.bf16.gmra.mrb[0].mxu0 %v769
        %v932 = vpop.f32.mrb[0].mxu0
        %v933 = vadd.f32 %v800, %v932
        %v934 = vpop.f32.mrb[0].mxu0
        %v935 = vpop.f32.mrb[0].mxu0
        %v936 = vadd.f32 %v800, %v935
        %v937 = vpop.f32.mrb[0].mxu0
        %938 = vmatprep.mubr.bf16.mxu0 0
        %939 = vmatmul.mubr.bf16.gmra.mrb[0].mxu0 %v770
        %v940 = vpop.f32.mrb[0].mxu0
        %v941 = vadd.f32 %v800, %v940
        %v942 = vpop.f32.mrb[0].mxu0
        %v943 = vpop.f32.mrb[0].mxu0
        %v944 = vadd.f32 %v800, %v943
        %v945 = vpop.f32.mrb[0].mxu0
        %946 = vmatprep.mubr.bf16.mxu0 0
        %947 = vmatmul.mubr.bf16.gmra.mrb[0].mxu0 %v771
        %v948 = vpop.f32.mrb[0].mxu0
        %v949 = vadd.f32 %v800, %v948
        %v950 = vpop.f32.mrb[0].mxu0
        %v951 = vpop.f32.mrb[0].mxu0
        %v952 = vadd.f32 %v800, %v951
        %v953 = vpop.f32.mrb[0].mxu0
        %954 = vmatprep.mubr.bf16.mxu0 0
        %955 = vmatmul.mubr.bf16.gmra.mrb[0].mxu0 %v772
        %v956 = vpop.f32.mrb[0].mxu0
        %v957 = vadd.f32 %v800, %v956
        %v958 = vpop.f32.mrb[0].mxu0
        %v959 = vpop.f32.mrb[0].mxu0
        %v960 = vadd.f32 %v800, %v959
        %v961 = vpop.f32.mrb[0].mxu0
        %962 = vmatprep.mubr.bf16.mxu0 0
        %963 = vmatmul.mubr.bf16.gmra.mrb[0].mxu0 %v773
        %v964 = vpop.f32.mrb[0].mxu0
        %v965 = vadd.f32 %v800, %v964
        %v966 = vpop.f32.mrb[0].mxu0
        %v967 = vpop.f32.mrb[0].mxu0
        %v968 = vadd.f32 %v800, %v967
        %v969 = vpop.f32.mrb[0].mxu0
        %970 = vmatprep.mubr.bf16.mxu0 0
        %971 = vmatmul.mubr.bf16.gmra.mrb[0].mxu0 %v774
        %v972 = vpop.f32.mrb[0].mxu0
        %v973 = vadd.f32 %v800, %v972
        %v974 = vpop.f32.mrb[0].mxu0
        %v975 = vpop.f32.mrb[0].mxu0
        %v976 = vadd.f32 %v800, %v975
        %v977 = vpop.f32.mrb[0].mxu0
        %978 = vmatprep.mubr.bf16.mxu0 0
        %979 = vmatmul.mubr.bf16.gmra.mrb[0].mxu0 %v775
        %v980 = vpop.f32.mrb[0].mxu0
        %v981 = vadd.f32 %v800, %v980
        %v982 = vpop.f32.mrb[0].mxu0
        %v983 = vpop.f32.mrb[0].mxu0
        %v984 = vadd.f32 %v800, %v983
        %v985 = vpop.f32.mrb[0].mxu0
        %986 = vmatprep.mubr.bf16.mxu0 0
        %987 = vmatmul.mubr.bf16.gmra.mrb[0].mxu0 %v776
        %v988 = vpop.f32.mrb[0].mxu0
        %v989 = vadd.f32 %v800, %v988
        %v990 = vpop.f32.mrb[0].mxu0
        %v991 = vpop.f32.mrb[0].mxu0
        %v992 = vadd.f32 %v800, %v991
        %v993 = vpop.f32.mrb[0].mxu0
        %994 = vmatprep.mubr.bf16.mxu0 0
        %995 = vmatmul.mubr.bf16.gmra.mrb[0].mxu0 %v777
        %v996 = vpop.f32.mrb[0].mxu0
        %v997 = vadd.f32 %v800, %v996
        %v998 = vpop.f32.mrb[0].mxu0
        %v999 = vpop.f32.mrb[0].mxu0
        %v1000 = vadd.f32 %v800, %v999
        %v1001 = vpop.f32.mrb[0].mxu0
        %1002 = vmatprep.mubr.bf16.mxu0 0
        %1003 = vmatmul.mubr.bf16.gmra.mrb[0].mxu0 %v778
        %v1004 = vpop.f32.mrb[0].mxu0
        %v1005 = vadd.f32 %v800, %v1004
        %v1006 = vpop.f32.mrb[0].mxu0
        %v1007 = vpop.f32.mrb[0].mxu0
        %v1008 = vadd.f32 %v800, %v1007
        %v1009 = vpop.f32.mrb[0].mxu0
        %1010 = vdwg.mxu0
        %v1011 = vmax.f32 %v885, 0.0
        %v1012 = vmax.f32 %v888, 0.0
        %v1013 = vmax.f32 %v893, 0.0
        %v1014 = vmax.f32 %v896, 0.0
        %v1015 = vmax.f32 %v901, 0.0
        %v1016 = vmax.f32 %v904, 0.0
        %v1017 = vmax.f32 %v909, 0.0
        %v1018 = vmax.f32 %v912, 0.0
        %v1019 = vmax.f32 %v917, 0.0
        %v1020 = vmax.f32 %v920, 0.0
        %v1021 = vmax.f32 %v925, 0.0
        %v1022 = vmax.f32 %v928, 0.0
        %v1023 = vmax.f32 %v933, 0.0
        %v1024 = vmax.f32 %v936, 0.0
        %v1025 = vmax.f32 %v941, 0.0
        %v1026 = vmax.f32 %v944, 0.0
        %v1027 = vmax.f32 %v949, 0.0
        %v1028 = vmax.f32 %v952, 0.0
        %v1029 = vmax.f32 %v957, 0.0
        %v1030 = vmax.f32 %v960, 0.0
        %v1031 = vmax.f32 %v965, 0.0
        %v1032 = vmax.f32 %v968, 0.0
        %v1033 = vmax.f32 %v973, 0.0
        %v1034 = vmax.f32 %v976, 0.0
        %v1035 = vmax.f32 %v981, 0.0
        %v1036 = vmax.f32 %v984, 0.0
        %v1037 = vmax.f32 %v989, 0.0
        %v1038 = vmax.f32 %v992, 0.0
        %v1039 = vmax.f32 %v997, 0.0
        %v1040 = vmax.f32 %v1000, 0.0
        %v1041 = vmax.f32 %v1005, 0.0
        %v1042 = vmax.f32 %v1008, 0.0
        %v1043 = vpack.c.bf16 %v1012, %v1011
        %v1044 = vpack.c.bf16 %v1014, %v1013
        %v1045 = vpack.c.bf16 %v1016, %v1015
        %v1046 = vpack.c.bf16 %v1018, %v1017
        %v1047 = vpack.c.bf16 %v1020, %v1019
        %v1048 = vpack.c.bf16 %v1022, %v1021
        %v1049 = vpack.c.bf16 %v1024, %v1023
        %v1050 = vpack.c.bf16 %v1026, %v1025
        %v1051 = vpack.c.bf16 %v1028, %v1027
        %v1052 = vpack.c.bf16 %v1030, %v1029
        %v1053 = vpack.c.bf16 %v1032, %v1031
        %v1054 = vpack.c.bf16 %v1034, %v1033
        %v1055 = vpack.c.bf16 %v1036, %v1035
        %v1056 = vpack.c.bf16 %v1038, %v1037
        %v1057 = vpack.c.bf16 %v1040, %v1039
        %v1058 = vpack.c.bf16 %v1042, %v1041
        %1059 = vst [vmem:[#allocation2] sm:$0xff] %v1043
        %1060 = vst [vmem:[#allocation2 + $0x8] sm:$0xff] %v1044
        %1061 = vst [vmem:[#allocation2 + $0x10] sm:$0xff] %v1045
        %1062 = vst [vmem:[#allocation2 + $0x18] sm:$0xff] %v1046
        %1063 = vst [vmem:[#allocation2 + $0x20] sm:$0xff] %v1047
        %1064 = vst [vmem:[#allocation2 + $0x28] sm:$0xff] %v1048
        %1065 = vst [vmem:[#allocation2 + $0x30] sm:$0xff] %v1049
        %1066 = vst [vmem:[#allocation2 + $0x38] sm:$0xff] %v1050
        %1067 = vst [vmem:[#allocation2 + $0x40] sm:$0xff] %v1051
        %1068 = vst [vmem:[#allocation2 + $0x48] sm:$0xff] %v1052
        %1069 = vst [vmem:[#allocation2 + $0x50] sm:$0xff] %v1053
        %1070 = vst [vmem:[#allocation2 + $0x58] sm:$0xff] %v1054
        %1071 = vst [vmem:[#allocation2 + $0x60] sm:$0xff] %v1055
        %1072 = vst [vmem:[#allocation2 + $0x68] sm:$0xff] %v1056
        %1073 = vst [vmem:[#allocation2 + $0x70] sm:$0xff] %v1057
        %1074 = vst [vmem:[#allocation2 + $0x78] sm:$0xff] %v1058
        %p1075 = scmp.eq.s32.totalorder %s18, 2
        // Predicated region
        $region53: #{tpu_custom_call.1} parent=35 // pred_check
          %p1076 = pneg %p1075
        $region54: #{tpu_custom_call.1} parent=35 // pred_check_branch
          %1078 = sbr.rel (%p1076) target = $region56
        $region55: #{tpu_custom_call.1} parent=35 // pred_region
          %1079 = vst [vmem:[#allocation9] sm:$0xff] %v885
          %1080 = vst [vmem:[#allocation9 + $0x8] sm:$0xff] %v888
          %1081 = vst [vmem:[#allocation9 + $0x10] sm:$0xff] %v893
          %1082 = vst [vmem:[#allocation9 + $0x18] sm:$0xff] %v896
          %1083 = vst [vmem:[#allocation9 + $0x20] sm:$0xff] %v901
          %1084 = vst [vmem:[#allocation9 + $0x28] sm:$0xff] %v904
          %1085 = vst [vmem:[#allocation9 + $0x30] sm:$0xff] %v909
          %1086 = vst [vmem:[#allocation9 + $0x38] sm:$0xff] %v912
          %1087 = vst [vmem:[#allocation9 + $0x40] sm:$0xff] %v917
          %1088 = vst [vmem:[#allocation9 + $0x48] sm:$0xff] %v920
          %1089 = vst [vmem:[#allocation9 + $0x50] sm:$0xff] %v925
          %1090 = vst [vmem:[#allocation9 + $0x58] sm:$0xff] %v928
          %1091 = vst [vmem:[#allocation9 + $0x60] sm:$0xff] %v933
          %1092 = vst [vmem:[#allocation9 + $0x68] sm:$0xff] %v936
          %1093 = vst [vmem:[#allocation9 + $0x70] sm:$0xff] %v941
          %1094 = vst [vmem:[#allocation9 + $0x78] sm:$0xff] %v944
          %1095 = vst [vmem:[#allocation9 + $0x80] sm:$0xff] %v949
          %1096 = vst [vmem:[#allocation9 + $0x88] sm:$0xff] %v952
          %1097 = vst [vmem:[#allocation9 + $0x90] sm:$0xff] %v957
          %1098 = vst [vmem:[#allocation9 + $0x98] sm:$0xff] %v960
          %1099 = vst [vmem:[#allocation9 + $0xa0] sm:$0xff] %v965
          %1100 = vst [vmem:[#allocation9 + $0xa8] sm:$0xff] %v968
          %1101 = vst [vmem:[#allocation9 + $0xb0] sm:$0xff] %v973
          %1102 = vst [vmem:[#allocation9 + $0xb8] sm:$0xff] %v976
          %1103 = vst [vmem:[#allocation9 + $0xc0] sm:$0xff] %v981
          %1104 = vst [vmem:[#allocation9 + $0xc8] sm:$0xff] %v984
          %1105 = vst [vmem:[#allocation9 + $0xd0] sm:$0xff] %v989
          %1106 = vst [vmem:[#allocation9 + $0xd8] sm:$0xff] %v992
          %1107 = vst [vmem:[#allocation9 + $0xe0] sm:$0xff] %v997
          %1108 = vst [vmem:[#allocation9 + $0xe8] sm:$0xff] %v1000
          %1109 = vst [vmem:[#allocation9 + $0xf0] sm:$0xff] %v1005
          %1110 = vst [vmem:[#allocation9 + $0xf8] sm:$0xff] %v1008
        $region56: #{tpu_custom_call.1} parent=35 // pred_fallthru
          _
        // Predicated region
        $region57: #{tpu_custom_call.1} parent=35 // pred_check
          %p1111 = pneg %p125
        $region58: #{tpu_custom_call.1} parent=35 // pred_check_branch
          %1113 = sbr.rel (%p1111) target = $region60
        $region59: #{tpu_custom_call.1} parent=35 // pred_region
          %s1115 = ssub.s32 4096, 4096
          %1116 = vsyncadd [#allocation5], %s1115
          %s1117 = sshll.u32 [#allocation9], 4
          %s1118 = int_to_ptr.vmem [resolvable:$true] %s1117
          %1123 = dma.vmem_to_hbm [thread:$0]  %s1118, 4096, %s4, [#allocation5], 128, 128, 8
        $region60: #{tpu_custom_call.1} parent=35 // pred_fallthru
          _
        // Predicated region
        $region61: #{tpu_custom_call.1} parent=35 // pred_check
          %p1124 = pneg %p125
        $region62: #{tpu_custom_call.1} parent=35 // pred_check_branch
          %1126 = sbr.rel (%p1124) target = $region64
        $region63: #{tpu_custom_call.1} parent=35 // pred_region
          %1127 = dma.done [#allocation5], 4096
        $region64: #{tpu_custom_call.1} parent=35 // pred_fallthru
          _
      $region36: #{tpu_custom_call.1} parent=5 // pred_fallthru
        _
      %p1128 = scmp.le.s32.totalorder 2, %s13
      // Predicated region
      $region65: #{tpu_custom_call.1} parent=5 // pred_check
        %p1129 = pneg %p1128
      $region66: #{tpu_custom_call.1} parent=5 // pred_check_branch
        %1131 = sbr.rel (%p1129) target = $region68
      $region67: #{tpu_custom_call.1} parent=5 // pred_region
        %s1132 = ssub.s32 %s13, 2
      $region68: #{tpu_custom_call.1} parent=5 // pred_fallthru
        _
    $region6: #{tpu_custom_call.1} parent=1 // loop_footer
      %s17 = sadd.s32 1, %s13
    $region7: #{tpu_custom_call.1} parent=1 // loop_footer_branch
      %12 = sbr.rel target = $region3
    $region8: #{tpu_custom_call.1} parent=1 // loop_exit
      _
    %1133 = vsyncpa [#allocation4], 1
    %s1134 = scalar_lea.sflag [#allocation4], 1
    %1135 = vsyncpa %s1134, 1
    %1136 = vsyncpa [#allocation7], 1
    %1137 = vsyncpa [#allocation5], 1
    %s1138 = scalar_lea.sflag [#allocation5], 1
    %1139 = vsyncpa %s1138, 1

</llo_original>
